<compile_context>
chip_gen: v6e
topology: v6e:2x2x1
jax: 0.10.0
libtpu: 0.0.40
codegen_flags: <defaults>
</compile_context>

<pallas_src>
import functools

import jax
import jax.numpy as jnp
from jax import lax
from jax.experimental import pallas as pl
from jax.experimental.pallas import tpu as pltpu

_VMEM_LIMIT = 48 * 1024 * 1024


def _round_up(v, m):
    return ((v + m - 1) // m) * m


def _pick_batch_tile(b, t, dp, target_rows=512, max_tile_bytes=6 << 20):
    """Batch-slice width per grid step. Always a multiple of 8 so the in-kernel
    (T, tile_b, Dp) <-> (T*tile_b, Dp) reshapes are layout-preserving, sized so
    T*tile_b lands near `target_rows`, and giving >= 2 grid steps whenever the
    (8-padded) batch allows it (megacore / dual-TC sharding)."""
    b8 = _round_up(b, 8)
    tb = max(8, ((target_rows // max(t, 1)) // 8) * 8)
    while tb > 8 and t * tb * dp * 4 > max_tile_bytes:   # cap the f32 work tile
        tb -= 8
    tb = min(tb, b8)
    while tb > 8 and b8 % tb != 0:                        # avoid padded-batch work
        tb -= 8
    if b8 >= 16 and b8 // tb < 2:                         # >= 2 parallel grid steps
        tb = max(8, ((b8 // 2) // 8) * 8)
    return tb


def _fused_kernel(x_ref, g1_ref, be1_ref, w1_ref, b1_ref, w2_ref, b2_ref,
                  g2_ref, be2_ref, o_ref, acc_ref, *, d_real, h_chunk):
    """Full SelfPoolingLayer forward on one (T, tile_b, Dp) batch slice.

    Rows of the 2-D working view are (t, b_local)-major with stride tile_b, so
    the T-shift of the pooling window is a sublane roll by tile_b rows; the
    t==0 / t==T-1 boundaries live inside the tile -> zero halo traffic."""
    t_len, tile_b, dp = x_ref.shape
    rows = t_len * tile_b
    hp = w1_ref.shape[1]

    # ---- residual + AvgPool1d(3, stride=1, pad=1, count_include_pad=False) ----
    xc = x_ref[...].reshape(rows, dp).astype(jnp.float32)
    up = pltpu.roll(xc, shift=tile_b, axis=0)             # row r - tile_b  (t-1)
    down = pltpu.roll(xc, shift=rows - tile_b, axis=0)    # row r + tile_b  (t+1)
    r = lax.broadcasted_iota(jnp.int32, (rows, 1), 0)
    has_prev = (r >= tile_b).astype(jnp.float32)          # t > 0
    has_next = (r < rows - tile_b).astype(jnp.float32)    # t < T-1
    pooled = xc + up * has_prev + down * has_next
    nbr = has_prev + has_next
    inv_cnt = jnp.where(nbr == 2.0, 1.0 / 3.0,
                        jnp.where(nbr == 1.0, 0.5, 1.0))
    x = xc + pooled * inv_cnt

    # ---- LayerNorm 1 (single pass; padded lanes are exactly zero) ----
    inv_d = 1.0 / d_real
    mu = jnp.sum(x, axis=-1, keepdims=True) * inv_d
    var = jnp.maximum(jnp.sum(x * x, axis=-1, keepdims=True) * inv_d - mu * mu, 0.0)
    xn = (x - mu) * lax.rsqrt(var + 1e-5) * g1_ref[...] + be1_ref[...]

    # ---- FFN: Linear -> ReLU -> Linear, hidden dim chunked through a VMEM acc ----
    xb = xn.astype(w1_ref.dtype)
    acc_ref[...] = jnp.zeros_like(acc_ref)
    for c in range(0, hp, h_chunk):
        h = jnp.dot(xb, w1_ref[:, c:c + h_chunk],
                    preferred_element_type=jnp.float32) + b1_ref[:, c:c + h_chunk]
        h = jnp.maximum(h, 0.0)
        acc_ref[...] += jnp.dot(h.astype(w2_ref.dtype), w2_ref[c:c + h_chunk, :],
                                preferred_element_type=jnp.float32)
    v = xn + acc_ref[...] + b2_ref[...]

    # ---- LayerNorm 2 ----
    mu2 = jnp.sum(v, axis=-1, keepdims=True) * inv_d
    var2 = jnp.maximum(jnp.sum(v * v, axis=-1, keepdims=True) * inv_d - mu2 * mu2, 0.0)
    out = (v - mu2) * lax.rsqrt(var2 + 1e-5) * g2_ref[...] + be2_ref[...]
    o_ref[...] = out.reshape(t_len, tile_b, dp).astype(o_ref.dtype)


def self_pooling_layer(x, params, *, mxu_dtype=jnp.bfloat16, target_rows=512):
    """x: (T, B, D). Returns (T, B, D) (eval-mode forward of SelfPoolingLayer)."""
    T, B, D = x.shape
    H = params["w1"].shape[1]
    Dp = _round_up(D, 128)
    Hp = _round_up(H, 128)
    tile_b = _pick_batch_tile(B, T, Dp, target_rows)
    B_pad = _round_up(B, tile_b)

    xw = x
    if (B_pad, Dp) != (B, D):
        xw = jnp.pad(x, ((0, 0), (0, B_pad - B), (0, Dp - D)))

    def pad2(a, rr, cc, dtype=jnp.float32):
        a = a.astype(dtype)
        if a.shape == (rr, cc):
            return a
        return jnp.pad(a, ((0, rr - a.shape[0]), (0, cc - a.shape[1])))

    g1 = pad2(params["g1"], 1, Dp)
    be1 = pad2(params["be1"], 1, Dp)
    g2 = pad2(params["g2"], 1, Dp)
    be2 = pad2(params["be2"], 1, Dp)
    b1 = pad2(params["b1"], 1, Hp)
    b2 = pad2(params["b2"], 1, Dp)
    w1 = pad2(params["w1"], Dp, Hp, dtype=mxu_dtype)   # (in, out), pre-transposed
    w2 = pad2(params["w2"], Hp, Dp, dtype=mxu_dtype)

    if Hp <= 512:
        h_chunk = Hp
    elif Hp % 512 == 0:
        h_chunk = 512
    elif Hp % 256 == 0:
        h_chunk = 256
    else:
        h_chunk = 128

    n_rows = T * B_pad
    in_bytes = jnp.dtype(x.dtype).itemsize
    w_bytes = jnp.dtype(mxu_dtype).itemsize
    cost = pl.CostEstimate(
        flops=4 * n_rows * Dp * Hp,
        transcendentals=2 * n_rows,
        bytes_accessed=2 * n_rows * Dp * in_bytes + 2 * Dp * Hp * w_bytes
                       + (Hp + 5 * Dp) * 4)

    out = pl.pallas_call(
        functools.partial(_fused_kernel, d_real=float(D), h_chunk=h_chunk),
        out_shape=jax.ShapeDtypeStruct((T, B_pad, Dp), x.dtype),
        grid=(B_pad // tile_b,),
        in_specs=[
            pl.BlockSpec((T, tile_b, Dp), lambda i: (0, i, 0)),   # x (batch slice)
            pl.BlockSpec((1, Dp), lambda i: (0, 0)),              # gamma1
            pl.BlockSpec((1, Dp), lambda i: (0, 0)),              # beta1
            pl.BlockSpec((Dp, Hp), lambda i: (0, 0)),             # w1 (resident)
            pl.BlockSpec((1, Hp), lambda i: (0, 0)),              # b1
            pl.BlockSpec((Hp, Dp), lambda i: (0, 0)),             # w2 (resident)
            pl.BlockSpec((1, Dp), lambda i: (0, 0)),              # b2
            pl.BlockSpec((1, Dp), lambda i: (0, 0)),              # gamma2
            pl.BlockSpec((1, Dp), lambda i: (0, 0)),              # beta2
        ],
        out_specs=pl.BlockSpec((T, tile_b, Dp), lambda i: (0, i, 0)),
        scratch_shapes=[pltpu.VMEM((T * tile_b, Dp), jnp.float32)],
        compiler_params=pltpu.CompilerParams(
            dimension_semantics=("parallel",),
            vmem_limit_bytes=_VMEM_LIMIT),
        cost_estimate=cost,
    )(xw, g1, be1, w1, b1, w2, b2, g2, be2)

    if (B_pad, Dp) != (B, D):
        out = out[:, :B, :D]
    return out


def reference(x, params):
    """Pure-JAX mirror of the PyTorch forward (eval mode)."""
    T, B, D = x.shape
    xb = jnp.transpose(x, (1, 2, 0))                                   # B d T
    pad = jnp.pad(xb, ((0, 0), (0, 0), (1, 1)))
    s = pad[..., :-2] + pad[..., 1:-1] + pad[..., 2:]
    t = jnp.arange(T)
    cnt = (3.0 - (t == 0) - (t == T - 1)).astype(jnp.float32)
    xb = xb + s / cnt
    x = jnp.transpose(xb, (2, 0, 1))                                   # T B d

    def ln(v, g, b):
        mu = v.mean(-1, keepdims=True)
        var = ((v - mu) ** 2).mean(-1, keepdims=True)
        return (v - mu) / jnp.sqrt(var + 1e-5) * g + b

    x = ln(x, params["g1"][0], params["be1"][0])
    h = jnp.maximum(x @ params["w1"] + params["b1"][0], 0.0)
    y = h @ params["w2"] + params["b2"][0]
    return ln(x + y, params["g2"][0], params["be2"][0])


if __name__ == "__main__":
    T, B, D = 8, 2, 32
    H = 4 * D

    key = jax.random.PRNGKey(0)
    kx, kw1, kb1, kw2, kb2, kg1, kg2, kbe1, kbe2 = jax.random.split(key, 9)

    lim1 = 1.0 / (D ** 0.5)
    lim2 = 1.0 / (H ** 0.5)
    params = {
        "g1": 1.0 + 0.1 * jax.random.normal(kg1, (1, D), jnp.float32),
        "be1": 0.1 * jax.random.normal(kbe1, (1, D), jnp.float32),
        "w1": jax.random.uniform(kw1, (D, H), jnp.float32, -lim1, lim1),
        "b1": jax.random.uniform(kb1, (1, H), jnp.float32, -lim1, lim1),
        "w2": jax.random.uniform(kw2, (H, D), jnp.float32, -lim2, lim2),
        "b2": jax.random.uniform(kb2, (1, D), jnp.float32, -lim2, lim2),
        "g2": 1.0 + 0.1 * jax.random.normal(kg2, (1, D), jnp.float32),
        "be2": 0.1 * jax.random.normal(kbe2, (1, D), jnp.float32),
    }
    x = jax.random.normal(kx, (T, B, D), jnp.float32)

    ref = jax.block_until_ready(reference(x, params))

    # Default (performance) path: bf16 MXU operands, f32 accumulation.
    run_bf16 = jax.jit(lambda xx, pp: self_pooling_layer(xx, pp))
    out_bf16 = jax.block_until_ready(run_bf16(x, params))
    assert out_bf16.shape == (T, B, D)
    assert jnp.allclose(out_bf16, ref, rtol=5e-2, atol=5e-2), \
        float(jnp.max(jnp.abs(out_bf16 - ref)))

    # Exactness check of the fused kernel logic with f32 MXU operands.
    run_f32 = jax.jit(lambda xx, pp: self_pooling_layer(xx, pp,
                                                        mxu_dtype=jnp.float32))
    out_f32 = jax.block_until_ready(run_f32(x, params))
    assert jnp.allclose(out_f32, ref, rtol=1e-4, atol=1e-4), \
        float(jnp.max(jnp.abs(out_f32 - ref)))

    print("KERNEL_OK")
</pallas_src>

<mosaic_0001>
module attributes {stable_mosaic.version = 11 : i64} {
  func.func @_fused_kernel(%arg0: i32, %arg1: memref<8x8x128xf32, #tpu.memory_space<vmem>>, %arg2: memref<1x128xf32, #tpu.memory_space<vmem>>, %arg3: memref<1x128xf32, #tpu.memory_space<vmem>>, %arg4: memref<128x128xbf16, #tpu.memory_space<vmem>>, %arg5: memref<1x128xf32, #tpu.memory_space<vmem>>, %arg6: memref<128x128xbf16, #tpu.memory_space<vmem>>, %arg7: memref<1x128xf32, #tpu.memory_space<vmem>>, %arg8: memref<1x128xf32, #tpu.memory_space<vmem>>, %arg9: memref<1x128xf32, #tpu.memory_space<vmem>>, %arg10: memref<8x8x128xf32, #tpu.memory_space<vmem>>, %arg11: memref<64x128xf32, #tpu.memory_space<vmem>>) attributes {dimension_semantics = [#tpu.dimension_semantics<parallel>], iteration_bounds = array<i64: 1>, scalar_prefetch = 0 : i64, scratch_operands = 1 : i64, tpu.core_type = #tpu.core_type<tc>, window_params = [{transform_indices = @transform_0, window_bounds = array<i64: 8, 8, 128>}, {pipeline_mode = #tpu.pipeline_mode<synchronous>, transform_indices = @transform_1, window_bounds = array<i64: 1, 128>}, {pipeline_mode = #tpu.pipeline_mode<synchronous>, transform_indices = @transform_2, window_bounds = array<i64: 1, 128>}, {pipeline_mode = #tpu.pipeline_mode<synchronous>, transform_indices = @transform_3, window_bounds = array<i64: 128, 128>}, {pipeline_mode = #tpu.pipeline_mode<synchronous>, transform_indices = @transform_4, window_bounds = array<i64: 1, 128>}, {pipeline_mode = #tpu.pipeline_mode<synchronous>, transform_indices = @transform_5, window_bounds = array<i64: 128, 128>}, {pipeline_mode = #tpu.pipeline_mode<synchronous>, transform_indices = @transform_6, window_bounds = array<i64: 1, 128>}, {pipeline_mode = #tpu.pipeline_mode<synchronous>, transform_indices = @transform_7, window_bounds = array<i64: 1, 128>}, {pipeline_mode = #tpu.pipeline_mode<synchronous>, transform_indices = @transform_8, window_bounds = array<i64: 1, 128>}, {transform_indices = @transform_9, window_bounds = array<i64: 8, 8, 128>}]} {
    %c0 = arith.constant 0 : index
    %c0_0 = arith.constant 0 : index
    %c0_1 = arith.constant 0 : index
    %0 = vector.load %arg1[%c0, %c0_0, %c0_1] : memref<8x8x128xf32, #tpu.memory_space<vmem>>, vector<8x8x128xf32>
    %1 = vector.shape_cast %0 : vector<8x8x128xf32> to vector<64x128xf32>
    %c8_i32 = arith.constant 8 : i32
    %2 = tpu.dynamic_rotate %1 by %c8_i32 dim 0 : vector<64x128xf32>, i32 -> vector<64x128xf32>
    %c56_i32 = arith.constant 56 : i32
    %3 = tpu.dynamic_rotate %1 by %c56_i32 dim 0 : vector<64x128xf32>, i32 -> vector<64x128xf32>
    %4 = tpu.iota {dimensions = array<i32: 0>} : vector<64x1xi32>
    %c8_i32_2 = arith.constant 8 : i32
    %5 = vector.broadcast %c8_i32_2 : i32 to vector<64x1xi32>
    %6 = arith.cmpi sge, %4, %5 : vector<64x1xi32>
    %7 = arith.extui %6 : vector<64x1xi1> to vector<64x1xi32>
    %8 = arith.sitofp %7 : vector<64x1xi32> to vector<64x1xf32>
    %c56_i32_3 = arith.constant 56 : i32
    %9 = vector.broadcast %c56_i32_3 : i32 to vector<64x1xi32>
    %10 = arith.cmpi slt, %4, %9 : vector<64x1xi32>
    %11 = arith.extui %10 : vector<64x1xi1> to vector<64x1xi32>
    %12 = arith.sitofp %11 : vector<64x1xi32> to vector<64x1xf32>
    %13 = vector.broadcast %8 : vector<64x1xf32> to vector<64x128xf32>
    %14 = arith.mulf %2, %13 : vector<64x128xf32>
    %15 = arith.addf %1, %14 : vector<64x128xf32>
    %16 = vector.broadcast %12 : vector<64x1xf32> to vector<64x128xf32>
    %17 = arith.mulf %3, %16 : vector<64x128xf32>
    %18 = arith.addf %15, %17 : vector<64x128xf32>
    %19 = arith.addf %8, %12 : vector<64x1xf32>
    %cst = arith.constant 2.000000e+00 : f32
    %20 = vector.broadcast %cst : f32 to vector<64x1xf32>
    %21 = arith.cmpf oeq, %19, %20 : vector<64x1xf32>
    %cst_4 = arith.constant 1.000000e+00 : f32
    %22 = vector.broadcast %cst_4 : f32 to vector<64x1xf32>
    %23 = arith.cmpf oeq, %19, %22 : vector<64x1xf32>
    %cst_5 = arith.constant 5.000000e-01 : f32
    %cst_6 = arith.constant 1.000000e+00 : f32
    %24 = vector.broadcast %cst_5 : f32 to vector<64x1xf32>
    %25 = vector.broadcast %cst_6 : f32 to vector<64x1xf32>
    %26 = arith.select %23, %24, %25 : vector<64x1xi1>, vector<64x1xf32>
    %cst_7 = arith.constant 0.333333343 : f32
    %27 = vector.broadcast %cst_7 : f32 to vector<64x1xf32>
    %28 = arith.select %21, %27, %26 : vector<64x1xi1>, vector<64x1xf32>
    %29 = vector.broadcast %28 : vector<64x1xf32> to vector<64x128xf32>
    %30 = arith.mulf %18, %29 : vector<64x128xf32>
    %31 = arith.addf %1, %30 : vector<64x128xf32>
    %cst_8 = arith.constant dense<0.000000e+00> : vector<64xf32>
    %32 = vector.multi_reduction <add>, %31, %cst_8 [1] : vector<64x128xf32> to vector<64xf32>
    %33 = vector.shape_cast %32 : vector<64xf32> to vector<64x1xf32>
    %cst_9 = arith.constant 3.125000e-02 : f32
    %34 = vector.broadcast %cst_9 : f32 to vector<64x1xf32>
    %35 = arith.mulf %33, %34 : vector<64x1xf32>
    %36 = arith.mulf %31, %31 : vector<64x128xf32>
    %cst_10 = arith.constant dense<0.000000e+00> : vector<64xf32>
    %37 = vector.multi_reduction <add>, %36, %cst_10 [1] : vector<64x128xf32> to vector<64xf32>
    %38 = vector.shape_cast %37 : vector<64xf32> to vector<64x1xf32>
    %cst_11 = arith.constant 3.125000e-02 : f32
    %39 = vector.broadcast %cst_11 : f32 to vector<64x1xf32>
    %40 = arith.mulf %38, %39 : vector<64x1xf32>
    %41 = arith.mulf %35, %35 : vector<64x1xf32>
    %42 = arith.subf %40, %41 : vector<64x1xf32>
    %cst_12 = arith.constant 0.000000e+00 : f32
    %43 = vector.broadcast %cst_12 : f32 to vector<64x1xf32>
    %44 = arith.maximumf %42, %43 : vector<64x1xf32>
    %45 = vector.broadcast %35 : vector<64x1xf32> to vector<64x128xf32>
    %46 = arith.subf %31, %45 : vector<64x128xf32>
    %cst_13 = arith.constant 9.99999974E-6 : f32
    %47 = vector.broadcast %cst_13 : f32 to vector<64x1xf32>
    %48 = arith.addf %44, %47 : vector<64x1xf32>
    %49 = math.rsqrt %48 : vector<64x1xf32>
    %50 = vector.broadcast %49 : vector<64x1xf32> to vector<64x128xf32>
    %51 = arith.mulf %46, %50 : vector<64x128xf32>
    %c0_14 = arith.constant 0 : index
    %c0_15 = arith.constant 0 : index
    %52 = vector.load %arg2[%c0_14, %c0_15] : memref<1x128xf32, #tpu.memory_space<vmem>>, vector<1x128xf32>
    %53 = vector.broadcast %52 : vector<1x128xf32> to vector<64x128xf32>
    %54 = arith.mulf %51, %53 : vector<64x128xf32>
    %c0_16 = arith.constant 0 : index
    %c0_17 = arith.constant 0 : index
    %55 = vector.load %arg3[%c0_16, %c0_17] : memref<1x128xf32, #tpu.memory_space<vmem>>, vector<1x128xf32>
    %56 = vector.broadcast %55 : vector<1x128xf32> to vector<64x128xf32>
    %57 = arith.addf %54, %56 : vector<64x128xf32>
    %58 = arith.truncf %57 : vector<64x128xf32> to vector<64x128xbf16>
    %cst_18 = arith.constant 0.000000e+00 : f32
    %59 = vector.broadcast %cst_18 : f32 to vector<64x128xf32>
    %c0_19 = arith.constant 0 : index
    %c0_20 = arith.constant 0 : index
    %60 = vector.load %arg11[%c0_19, %c0_20] : memref<64x128xf32, #tpu.memory_space<vmem>>, vector<64x128xf32>
    tpu.vector_store %arg11[%c0_19, %c0_20], %59 {strides = array<i32>} : memref<64x128xf32, #tpu.memory_space<vmem>>, vector<64x128xf32>,
    %c0_21 = arith.constant 0 : index
    %c0_22 = arith.constant 0 : index
    %61 = vector.load %arg4[%c0_21, %c0_22] : memref<128x128xbf16, #tpu.memory_space<vmem>>, vector<128x128xbf16>
    %cst_23 = arith.constant dense<0.000000e+00> : vector<64x128xf32>
    %62 = tpu.matmul %58, %61, %cst_23 {dimension_numbers = #tpu.dot_dimension_numbers<[1], [0], [0], [1], [0, 0, 1, 1], [], []>} : vector<64x128xbf16>, vector<128x128xbf16>, vector<64x128xf32> -> vector<64x128xf32>
    %c0_24 = arith.constant 0 : index
    %c0_25 = arith.constant 0 : index
    %63 = vector.load %arg5[%c0_24, %c0_25] : memref<1x128xf32, #tpu.memory_space<vmem>>, vector<1x128xf32>
    %64 = vector.broadcast %63 : vector<1x128xf32> to vector<64x128xf32>
    %65 = arith.addf %62, %64 : vector<64x128xf32>
    %cst_26 = arith.constant 0.000000e+00 : f32
    %66 = vector.broadcast %cst_26 : f32 to vector<64x128xf32>
    %67 = arith.maximumf %65, %66 : vector<64x128xf32>
    %c0_27 = arith.constant 0 : index
    %c0_28 = arith.constant 0 : index
    %68 = vector.load %arg11[%c0_27, %c0_28] : memref<64x128xf32, #tpu.memory_space<vmem>>, vector<64x128xf32>
    %69 = arith.truncf %67 : vector<64x128xf32> to vector<64x128xbf16>
    %c0_29 = arith.constant 0 : index
    %c0_30 = arith.constant 0 : index
    %70 = vector.load %arg6[%c0_29, %c0_30] : memref<128x128xbf16, #tpu.memory_space<vmem>>, vector<128x128xbf16>
    %cst_31 = arith.constant dense<0.000000e+00> : vector<64x128xf32>
    %71 = tpu.matmul %69, %70, %cst_31 {dimension_numbers = #tpu.dot_dimension_numbers<[1], [0], [0], [1], [0, 0, 1, 1], [], []>} : vector<64x128xbf16>, vector<128x128xbf16>, vector<64x128xf32> -> vector<64x128xf32>
    %72 = arith.addf %68, %71 : vector<64x128xf32>
    %c0_32 = arith.constant 0 : index
    %c0_33 = arith.constant 0 : index
    %73 = vector.load %arg11[%c0_32, %c0_33] : memref<64x128xf32, #tpu.memory_space<vmem>>, vector<64x128xf32>
    tpu.vector_store %arg11[%c0_32, %c0_33], %72 {strides = array<i32>} : memref<64x128xf32, #tpu.memory_space<vmem>>, vector<64x128xf32>,
    %c0_34 = arith.constant 0 : index
    %c0_35 = arith.constant 0 : index
    %74 = vector.load %arg11[%c0_34, %c0_35] : memref<64x128xf32, #tpu.memory_space<vmem>>, vector<64x128xf32>
    %75 = arith.addf %57, %74 : vector<64x128xf32>
    %c0_36 = arith.constant 0 : index
    %c0_37 = arith.constant 0 : index
    %76 = vector.load %arg7[%c0_36, %c0_37] : memref<1x128xf32, #tpu.memory_space<vmem>>, vector<1x128xf32>
    %77 = vector.broadcast %76 : vector<1x128xf32> to vector<64x128xf32>
    %78 = arith.addf %75, %77 : vector<64x128xf32>
    %cst_38 = arith.constant dense<0.000000e+00> : vector<64xf32>
    %79 = vector.multi_reduction <add>, %78, %cst_38 [1] : vector<64x128xf32> to vector<64xf32>
    %80 = vector.shape_cast %79 : vector<64xf32> to vector<64x1xf32>
    %cst_39 = arith.constant 3.125000e-02 : f32
    %81 = vector.broadcast %cst_39 : f32 to vector<64x1xf32>
    %82 = arith.mulf %80, %81 : vector<64x1xf32>
    %83 = arith.mulf %78, %78 : vector<64x128xf32>
    %cst_40 = arith.constant dense<0.000000e+00> : vector<64xf32>
    %84 = vector.multi_reduction <add>, %83, %cst_40 [1] : vector<64x128xf32> to vector<64xf32>
    %85 = vector.shape_cast %84 : vector<64xf32> to vector<64x1xf32>
    %cst_41 = arith.constant 3.125000e-02 : f32
    %86 = vector.broadcast %cst_41 : f32 to vector<64x1xf32>
    %87 = arith.mulf %85, %86 : vector<64x1xf32>
    %88 = arith.mulf %82, %82 : vector<64x1xf32>
    %89 = arith.subf %87, %88 : vector<64x1xf32>
    %cst_42 = arith.constant 0.000000e+00 : f32
    %90 = vector.broadcast %cst_42 : f32 to vector<64x1xf32>
    %91 = arith.maximumf %89, %90 : vector<64x1xf32>
    %92 = vector.broadcast %82 : vector<64x1xf32> to vector<64x128xf32>
    %93 = arith.subf %78, %92 : vector<64x128xf32>
    %cst_43 = arith.constant 9.99999974E-6 : f32
    %94 = vector.broadcast %cst_43 : f32 to vector<64x1xf32>
    %95 = arith.addf %91, %94 : vector<64x1xf32>
    %96 = math.rsqrt %95 : vector<64x1xf32>
    %97 = vector.broadcast %96 : vector<64x1xf32> to vector<64x128xf32>
    %98 = arith.mulf %93, %97 : vector<64x128xf32>
    %c0_44 = arith.constant 0 : index
    %c0_45 = arith.constant 0 : index
    %99 = vector.load %arg8[%c0_44, %c0_45] : memref<1x128xf32, #tpu.memory_space<vmem>>, vector<1x128xf32>
    %100 = vector.broadcast %99 : vector<1x128xf32> to vector<64x128xf32>
    %101 = arith.mulf %98, %100 : vector<64x128xf32>
    %c0_46 = arith.constant 0 : index
    %c0_47 = arith.constant 0 : index
    %102 = vector.load %arg9[%c0_46, %c0_47] : memref<1x128xf32, #tpu.memory_space<vmem>>, vector<1x128xf32>
    %103 = vector.broadcast %102 : vector<1x128xf32> to vector<64x128xf32>
    %104 = arith.addf %101, %103 : vector<64x128xf32>
    %105 = vector.shape_cast %104 : vector<64x128xf32> to vector<8x8x128xf32>
    %c0_48 = arith.constant 0 : index
    %c0_49 = arith.constant 0 : index
    %c0_50 = arith.constant 0 : index
    %106 = vector.load %arg10[%c0_48, %c0_49, %c0_50] : memref<8x8x128xf32, #tpu.memory_space<vmem>>, vector<8x8x128xf32>
    tpu.vector_store %arg10[%c0_48, %c0_49, %c0_50], %105 {strides = array<i32>} : memref<8x8x128xf32, #tpu.memory_space<vmem>>, vector<8x8x128xf32>,
    return
  }
  func.func @transform_0(%arg0: i32) -> (i32, i32, i32) {
    %c0_i32 = arith.constant 0 : i32
    %c0_i32_0 = arith.constant 0 : i32
    %c0_i32_1 = arith.constant 0 : i32
    return %c0_i32, %arg0, %c0_i32_0 : i32, i32, i32
  }
  func.func @transform_1(%arg0: i32) -> (i32, i32) {
    %c0_i32 = arith.constant 0 : i32
    %c0_i32_0 = arith.constant 0 : i32
    %c0_i32_1 = arith.constant 0 : i32
    return %c0_i32, %c0_i32_0 : i32, i32
  }
  func.func @transform_2(%arg0: i32) -> (i32, i32) {
    %c0_i32 = arith.constant 0 : i32
    %c0_i32_0 = arith.constant 0 : i32
    %c0_i32_1 = arith.constant 0 : i32
    return %c0_i32, %c0_i32_0 : i32, i32
  }
  func.func @transform_3(%arg0: i32) -> (i32, i32) {
    %c0_i32 = arith.constant 0 : i32
    %c0_i32_0 = arith.constant 0 : i32
    %c0_i32_1 = arith.constant 0 : i32
    return %c0_i32, %c0_i32_0 : i32, i32
  }
  func.func @transform_4(%arg0: i32) -> (i32, i32) {
    %c0_i32 = arith.constant 0 : i32
    %c0_i32_0 = arith.constant 0 : i32
    %c0_i32_1 = arith.constant 0 : i32
    return %c0_i32, %c0_i32_0 : i32, i32
  }
  func.func @transform_5(%arg0: i32) -> (i32, i32) {
    %c0_i32 = arith.constant 0 : i32
    %c0_i32_0 = arith.constant 0 : i32
    %c0_i32_1 = arith.constant 0 : i32
    return %c0_i32, %c0_i32_0 : i32, i32
  }
  func.func @transform_6(%arg0: i32) -> (i32, i32) {
    %c0_i32 = arith.constant 0 : i32
    %c0_i32_0 = arith.constant 0 : i32
    %c0_i32_1 = arith.constant 0 : i32
    return %c0_i32, %c0_i32_0 : i32, i32
  }
  func.func @transform_7(%arg0: i32) -> (i32, i32) {
    %c0_i32 = arith.constant 0 : i32
    %c0_i32_0 = arith.constant 0 : i32
    %c0_i32_1 = arith.constant 0 : i32
    return %c0_i32, %c0_i32_0 : i32, i32
  }
  func.func @transform_8(%arg0: i32) -> (i32, i32) {
    %c0_i32 = arith.constant 0 : i32
    %c0_i32_0 = arith.constant 0 : i32
    %c0_i32_1 = arith.constant 0 : i32
    return %c0_i32, %c0_i32_0 : i32, i32
  }
  func.func @transform_9(%arg0: i32) -> (i32, i32, i32) {
    %c0_i32 = arith.constant 0 : i32
    %c0_i32_0 = arith.constant 0 : i32
    %c0_i32_1 = arith.constant 0 : i32
    return %c0_i32, %arg0, %c0_i32_0 : i32, i32, i32
  }
}

</mosaic_0001>

<llo_original>
// kernel: _lambda_.1
$region0: #{_lambda_.1}
  #allocation0 [shape = 'u32[]', space=smem, size = 0x4, offset = 0x4, fixed_abs, tag = 'smem constant byte address 0x4 - core index']
  #allocation1 [shape = 'u32[144,128]{1,0:T(1,128)}', space=vmem, size = 0x12000, scoped, tag = 'internal scratch']
  #allocation2 [shape = 'f32[64,128]{1,0:T(8,128)}', space=vmem, size = 0x8000, scoped, tag = 'scratch operand']
  %s0 = inlined_call_operand.vmem [shape: f32[8,8,128], index: 0, kind: input, shape index: {}]
  %s1 = inlined_call_operand.vmem [shape: f32[1,128], index: 1, kind: input, shape index: {}]
  %s2 = inlined_call_operand.vmem [shape: f32[1,128], index: 2, kind: input, shape index: {}]
  %s3 = inlined_call_operand.vmem [shape: bf16[128,128], index: 3, kind: input, shape index: {}]
  %s4 = inlined_call_operand.vmem [shape: f32[1,128], index: 4, kind: input, shape index: {}]
  %s5 = inlined_call_operand.vmem [shape: bf16[128,128], index: 5, kind: input, shape index: {}]
  %s6 = inlined_call_operand.vmem [shape: f32[1,128], index: 6, kind: input, shape index: {}]
  %s7 = inlined_call_operand.vmem [shape: f32[1,128], index: 7, kind: input, shape index: {}]
  %s8 = inlined_call_operand.vmem [shape: f32[1,128], index: 8, kind: input, shape index: {}]
  %s9 = inlined_call_operand.vmem [shape: f32[8,8,128], index: 9, kind: output, shape index: {}]
  %s10 = sld [smem:[#allocation0]]
  $region46: #{_lambda_.1} parent=0
    _
  %s12 = ssub.s32 1, %s10
  %s13 = scalar_select 0, %s12, %s10
  // Predicated region
  $region2: #{_lambda_.1} parent=0 // pred_check
    _
  $region3: #{_lambda_.1} parent=0 // pred_check_branch
    %15 = sbr.rel (0) target = $region5
  $region4: #{_lambda_.1} parent=0 // pred_region
    _
  $region5: #{_lambda_.1} parent=0 // pred_fallthru
    _
  // Predicated region
  $region6: #{_lambda_.1} parent=0 // pred_check
    _
  $region7: #{_lambda_.1} parent=0 // pred_check_branch
    %17 = sbr.rel (0) target = $region9
  $region8: #{_lambda_.1} parent=0 // pred_region
    _
  $region9: #{_lambda_.1} parent=0 // pred_fallthru
    _
  // Predicated region
  $region10: #{_lambda_.1} parent=0 // pred_check
    _
  $region11: #{_lambda_.1} parent=0 // pred_check_branch
    %19 = sbr.rel (0) target = $region13
  $region12: #{_lambda_.1} parent=0 // pred_region
    _
  $region13: #{_lambda_.1} parent=0 // pred_fallthru
    _
  // Predicated region
  $region14: #{_lambda_.1} parent=0 // pred_check
    _
  $region15: #{_lambda_.1} parent=0 // pred_check_branch
    %21 = sbr.rel (0) target = $region17
  $region16: #{_lambda_.1} parent=0 // pred_region
    _
  $region17: #{_lambda_.1} parent=0 // pred_fallthru
    _
  // Predicated region
  $region18: #{_lambda_.1} parent=0 // pred_check
    _
  $region19: #{_lambda_.1} parent=0 // pred_check_branch
    %23 = sbr.rel (0) target = $region21
  $region20: #{_lambda_.1} parent=0 // pred_region
    _
  $region21: #{_lambda_.1} parent=0 // pred_fallthru
    _
  // Predicated region
  $region22: #{_lambda_.1} parent=0 // pred_check
    _
  $region23: #{_lambda_.1} parent=0 // pred_check_branch
    %25 = sbr.rel (0) target = $region25
  $region24: #{_lambda_.1} parent=0 // pred_region
    _
  $region25: #{_lambda_.1} parent=0 // pred_fallthru
    _
  // Predicated region
  $region26: #{_lambda_.1} parent=0 // pred_check
    _
  $region27: #{_lambda_.1} parent=0 // pred_check_branch
    %27 = sbr.rel (0) target = $region29
  $region28: #{_lambda_.1} parent=0 // pred_region
    _
  $region29: #{_lambda_.1} parent=0 // pred_fallthru
    _
  // Predicated region
  $region30: #{_lambda_.1} parent=0 // pred_check
    _
  $region31: #{_lambda_.1} parent=0 // pred_check_branch
    %29 = sbr.rel (0) target = $region33
  $region32: #{_lambda_.1} parent=0 // pred_region
    _
  $region33: #{_lambda_.1} parent=0 // pred_fallthru
    _
  // Predicated region
  $region34: #{_lambda_.1} parent=0 // pred_check
    _
  $region35: #{_lambda_.1} parent=0 // pred_check_branch
    %31 = sbr.rel (0) target = $region37
  $region36: #{_lambda_.1} parent=0 // pred_region
    _
  $region37: #{_lambda_.1} parent=0 // pred_fallthru
    _
  %v33 = vld [vmem:[%s0] sm:$0xff]
  %v34 = vld [vmem:[%s0 + $0x8] sm:$0xff]
  %v35 = vld [vmem:[%s0 + $0x10] sm:$0xff]
  %v36 = vld [vmem:[%s0 + $0x18] sm:$0xff]
  %v37 = vld [vmem:[%s0 + $0x20] sm:$0xff]
  %v38 = vld [vmem:[%s0 + $0x28] sm:$0xff]
  %v39 = vld [vmem:[%s0 + $0x30] sm:$0xff]
  %v40 = vld [vmem:[%s0 + $0x38] sm:$0xff]
  %v41 = vlaneseq
  %v42 = vshrl.u32 %v41, 7
  %v43 = vadd.s32 %v42, 8
  %v44 = vadd.s32 %v42, 16
  %v45 = vadd.s32 %v42, 24
  %v46 = vadd.s32 %v42, 32
  %v47 = vadd.s32 %v42, 40
  %v48 = vadd.s32 %v42, 48
  %v49 = vadd.s32 %v42, 56
  %vm50 = vcmp.ge.s32.totalorder %v42, 8
  %vm51 = vcmp.ge.s32.totalorder %v43, 8
  %vm52 = vcmp.ge.s32.totalorder %v44, 8
  %vm53 = vcmp.ge.s32.totalorder %v45, 8
  %vm54 = vcmp.ge.s32.totalorder %v46, 8
  %vm55 = vcmp.ge.s32.totalorder %v47, 8
  %vm56 = vcmp.ge.s32.totalorder %v48, 8
  %vm57 = vcmp.ge.s32.totalorder %v49, 8
  %v58 = vsel %vm50, 1, 0
  %v59 = vsel %vm51, 1, 0
  %v60 = vsel %vm52, 1, 0
  %v61 = vsel %vm53, 1, 0
  %v62 = vsel %vm54, 1, 0
  %v63 = vsel %vm55, 1, 0
  %v64 = vsel %vm56, 1, 0
  %v65 = vsel %vm57, 1, 0
  %v66 = vcvt.s32.f32 %v58
  %v67 = vcvt.s32.f32 %v59
  %v68 = vcvt.s32.f32 %v60
  %v69 = vcvt.s32.f32 %v61
  %v70 = vcvt.s32.f32 %v62
  %v71 = vcvt.s32.f32 %v63
  %v72 = vcvt.s32.f32 %v64
  %v73 = vcvt.s32.f32 %v65
  %vm74 = vcmp.lt.s32.totalorder %v42, 56
  %vm75 = vcmp.lt.s32.totalorder %v43, 56
  %vm76 = vcmp.lt.s32.totalorder %v44, 56
  %vm77 = vcmp.lt.s32.totalorder %v45, 56
  %vm78 = vcmp.lt.s32.totalorder %v46, 56
  %vm79 = vcmp.lt.s32.totalorder %v47, 56
  %vm80 = vcmp.lt.s32.totalorder %v48, 56
  %vm81 = vcmp.lt.s32.totalorder %v49, 56
  %v82 = vsel %vm74, 1, 0
  %v83 = vsel %vm75, 1, 0
  %v84 = vsel %vm76, 1, 0
  %v85 = vsel %vm77, 1, 0
  %v86 = vsel %vm78, 1, 0
  %v87 = vsel %vm79, 1, 0
  %v88 = vsel %vm80, 1, 0
  %v89 = vsel %vm81, 1, 0
  %v90 = vcvt.s32.f32 %v82
  %v91 = vcvt.s32.f32 %v83
  %v92 = vcvt.s32.f32 %v84
  %v93 = vcvt.s32.f32 %v85
  %v94 = vcvt.s32.f32 %v86
  %v95 = vcvt.s32.f32 %v87
  %v96 = vcvt.s32.f32 %v88
  %v97 = vcvt.s32.f32 %v89
  %v98 = vmul.f32 %v40, %v66
  %v99 = vmul.f32 %v33, %v67
  %v100 = vmul.f32 %v34, %v68
  %v101 = vmul.f32 %v35, %v69
  %v102 = vmul.f32 %v36, %v70
  %v103 = vmul.f32 %v37, %v71
  %v104 = vmul.f32 %v38, %v72
  %v105 = vmul.f32 %v39, %v73
  %v106 = vadd.f32 %v33, %v98
  %v107 = vadd.f32 %v34, %v99
  %v108 = vadd.f32 %v35, %v100
  %v109 = vadd.f32 %v36, %v101
  %v110 = vadd.f32 %v37, %v102
  %v111 = vadd.f32 %v38, %v103
  %v112 = vadd.f32 %v39, %v104
  %v113 = vadd.f32 %v40, %v105
  %v114 = vmul.f32 %v34, %v90
  %v115 = vmul.f32 %v35, %v91
  %v116 = vmul.f32 %v36, %v92
  %v117 = vmul.f32 %v37, %v93
  %v118 = vmul.f32 %v38, %v94
  %v119 = vmul.f32 %v39, %v95
  %v120 = vmul.f32 %v40, %v96
  %v121 = vmul.f32 %v33, %v97
  %v122 = vadd.f32 %v106, %v114
  %v123 = vadd.f32 %v107, %v115
  %v124 = vadd.f32 %v108, %v116
  %v125 = vadd.f32 %v109, %v117
  %v126 = vadd.f32 %v110, %v118
  %v127 = vadd.f32 %v111, %v119
  %v128 = vadd.f32 %v112, %v120
  %v129 = vadd.f32 %v113, %v121
  %v130 = vadd.f32 %v66, %v90
  %v131 = vadd.f32 %v67, %v91
  %v132 = vadd.f32 %v68, %v92
  %v133 = vadd.f32 %v69, %v93
  %v134 = vadd.f32 %v70, %v94
  %v135 = vadd.f32 %v71, %v95
  %v136 = vadd.f32 %v72, %v96
  %v137 = vadd.f32 %v73, %v97
  %vm138 = vcmp.eq.f32.partialorder %v130, 2.0
  %vm139 = vcmp.eq.f32.partialorder %v131, 2.0
  %vm140 = vcmp.eq.f32.partialorder %v132, 2.0
  %vm141 = vcmp.eq.f32.partialorder %v133, 2.0
  %vm142 = vcmp.eq.f32.partialorder %v134, 2.0
  %vm143 = vcmp.eq.f32.partialorder %v135, 2.0
  %vm144 = vcmp.eq.f32.partialorder %v136, 2.0
  %vm145 = vcmp.eq.f32.partialorder %v137, 2.0
  %vm146 = vcmp.eq.f32.partialorder %v130, 1.0
  %vm147 = vcmp.eq.f32.partialorder %v131, 1.0
  %vm148 = vcmp.eq.f32.partialorder %v132, 1.0
  %vm149 = vcmp.eq.f32.partialorder %v133, 1.0
  %vm150 = vcmp.eq.f32.partialorder %v134, 1.0
  %vm151 = vcmp.eq.f32.partialorder %v135, 1.0
  %vm152 = vcmp.eq.f32.partialorder %v136, 1.0
  %vm153 = vcmp.eq.f32.partialorder %v137, 1.0
  %v154 = vsel %vm146, 0.5, 1.0
  %v155 = vsel %vm147, 0.5, 1.0
  %v156 = vsel %vm148, 0.5, 1.0
  %v157 = vsel %vm149, 0.5, 1.0
  %v158 = vsel %vm150, 0.5, 1.0
  %v159 = vsel %vm151, 0.5, 1.0
  %v160 = vsel %vm152, 0.5, 1.0
  %v161 = vsel %vm153, 0.5, 1.0
  %v162 = vsel %vm138, 0.33333334, %v154
  %v163 = vsel %vm139, 0.33333334, %v155
  %v164 = vsel %vm140, 0.33333334, %v156
  %v165 = vsel %vm141, 0.33333334, %v157
  %v166 = vsel %vm142, 0.33333334, %v158
  %v167 = vsel %vm143, 0.33333334, %v159
  %v168 = vsel %vm144, 0.33333334, %v160
  %v169 = vsel %vm145, 0.33333334, %v161
  %v170 = vmul.f32 %v122, %v162
  %v171 = vmul.f32 %v123, %v163
  %v172 = vmul.f32 %v124, %v164
  %v173 = vmul.f32 %v125, %v165
  %v174 = vmul.f32 %v126, %v166
  %v175 = vmul.f32 %v127, %v167
  %v176 = vmul.f32 %v128, %v168
  %v177 = vmul.f32 %v129, %v169
  %v178 = vadd.f32 %v33, %v170
  %v179 = vadd.f32 %v34, %v171
  %v180 = vadd.f32 %v35, %v172
  %v181 = vadd.f32 %v36, %v173
  %v182 = vadd.f32 %v37, %v174
  %v183 = vadd.f32 %v38, %v175
  %v184 = vadd.f32 %v39, %v176
  %v185 = vadd.f32 %v40, %v177
  %186 = vadd.xlane.f32.xlu0 %v178
  %v187 = vpop.xlane.xlu0 %186
  %188 = vadd.xlane.f32.xlu0 %v179
  %v189 = vpop.xlane.xlu0 %188
  %190 = vadd.xlane.f32.xlu0 %v180
  %v191 = vpop.xlane.xlu0 %190
  %192 = vadd.xlane.f32.xlu0 %v181
  %v193 = vpop.xlane.xlu0 %192
  %194 = vadd.xlane.f32.xlu0 %v182
  %v195 = vpop.xlane.xlu0 %194
  %196 = vadd.xlane.f32.xlu0 %v183
  %v197 = vpop.xlane.xlu0 %196
  %198 = vadd.xlane.f32.xlu0 %v184
  %v199 = vpop.xlane.xlu0 %198
  %200 = vadd.xlane.f32.xlu0 %v185
  %v201 = vpop.xlane.xlu0 %200
  %v202 = vmul.f32 %v187, 0.03125
  %v203 = vmul.f32 %v189, 0.03125
  %v204 = vmul.f32 %v191, 0.03125
  %v205 = vmul.f32 %v193, 0.03125
  %v206 = vmul.f32 %v195, 0.03125
  %v207 = vmul.f32 %v197, 0.03125
  %v208 = vmul.f32 %v199, 0.03125
  %v209 = vmul.f32 %v201, 0.03125
  %v210 = vmul.f32 %v178, %v178
  %v211 = vmul.f32 %v179, %v179
  %v212 = vmul.f32 %v180, %v180
  %v213 = vmul.f32 %v181, %v181
  %v214 = vmul.f32 %v182, %v182
  %v215 = vmul.f32 %v183, %v183
  %v216 = vmul.f32 %v184, %v184
  %v217 = vmul.f32 %v185, %v185
  %218 = vadd.xlane.f32.xlu0 %v210
  %v219 = vpop.xlane.xlu0 %218
  %220 = vadd.xlane.f32.xlu0 %v211
  %v221 = vpop.xlane.xlu0 %220
  %222 = vadd.xlane.f32.xlu0 %v212
  %v223 = vpop.xlane.xlu0 %222
  %224 = vadd.xlane.f32.xlu0 %v213
  %v225 = vpop.xlane.xlu0 %224
  %226 = vadd.xlane.f32.xlu0 %v214
  %v227 = vpop.xlane.xlu0 %226
  %228 = vadd.xlane.f32.xlu0 %v215
  %v229 = vpop.xlane.xlu0 %228
  %230 = vadd.xlane.f32.xlu0 %v216
  %v231 = vpop.xlane.xlu0 %230
  %232 = vadd.xlane.f32.xlu0 %v217
  %v233 = vpop.xlane.xlu0 %232
  %v234 = vmul.f32 %v219, 0.03125
  %v235 = vmul.f32 %v221, 0.03125
  %v236 = vmul.f32 %v223, 0.03125
  %v237 = vmul.f32 %v225, 0.03125
  %v238 = vmul.f32 %v227, 0.03125
  %v239 = vmul.f32 %v229, 0.03125
  %v240 = vmul.f32 %v231, 0.03125
  %v241 = vmul.f32 %v233, 0.03125
  %v242 = vmul.f32 %v202, %v202
  %v243 = vmul.f32 %v203, %v203
  %v244 = vmul.f32 %v204, %v204
  %v245 = vmul.f32 %v205, %v205
  %v246 = vmul.f32 %v206, %v206
  %v247 = vmul.f32 %v207, %v207
  %v248 = vmul.f32 %v208, %v208
  %v249 = vmul.f32 %v209, %v209
  %v250 = vsub.f32 %v234, %v242
  %v251 = vsub.f32 %v235, %v243
  %v252 = vsub.f32 %v236, %v244
  %v253 = vsub.f32 %v237, %v245
  %v254 = vsub.f32 %v238, %v246
  %v255 = vsub.f32 %v239, %v247
  %v256 = vsub.f32 %v240, %v248
  %v257 = vsub.f32 %v241, %v249
  %v258 = vmax.f32 %v250, 0.0
  %v259 = vmax.f32 %v251, 0.0
  %v260 = vmax.f32 %v252, 0.0
  %v261 = vmax.f32 %v253, 0.0
  %v262 = vmax.f32 %v254, 0.0
  %v263 = vmax.f32 %v255, 0.0
  %v264 = vmax.f32 %v256, 0.0
  %v265 = vmax.f32 %v257, 0.0
  %v266 = vsub.f32 %v178, %v202
  %v267 = vsub.f32 %v179, %v203
  %v268 = vsub.f32 %v180, %v204
  %v269 = vsub.f32 %v181, %v205
  %v270 = vsub.f32 %v182, %v206
  %v271 = vsub.f32 %v183, %v207
  %v272 = vsub.f32 %v184, %v208
  %v273 = vsub.f32 %v185, %v209
  %v274 = vadd.f32 %v258, 1e-05
  %v275 = vadd.f32 %v259, 1e-05
  %v276 = vadd.f32 %v260, 1e-05
  %v277 = vadd.f32 %v261, 1e-05
  %v278 = vadd.f32 %v262, 1e-05
  %v279 = vadd.f32 %v263, 1e-05
  %v280 = vadd.f32 %v264, 1e-05
  %v281 = vadd.f32 %v265, 1e-05
  %v282 = vrsqrt.pop %v274
  %v283 = vrsqrt.pop %v275
  %v284 = vrsqrt.pop %v276
  %v285 = vrsqrt.pop %v277
  %v286 = vrsqrt.pop %v278
  %v287 = vrsqrt.pop %v279
  %v288 = vrsqrt.pop %v280
  %v289 = vrsqrt.pop %v281
  %v290 = vmul.f32 %v266, %v282
  %v291 = vmul.f32 %v267, %v283
  %v292 = vmul.f32 %v268, %v284
  %v293 = vmul.f32 %v269, %v285
  %v294 = vmul.f32 %v270, %v286
  %v295 = vmul.f32 %v271, %v287
  %v296 = vmul.f32 %v272, %v288
  %v297 = vmul.f32 %v273, %v289
  %v298 = vld [vmem:[%s1] sm:$0x1]
  %v300 = vlaneseq
  %v301 = vshrl.u32 %v300, 7
  %v302 = vsub.s32 0, %v301
  %v303 = vrot.slane %v298, %v302
  %v305 = vmul.f32 %v290, %v303
  %v306 = vmul.f32 %v291, %v303
  %v307 = vmul.f32 %v292, %v303
  %v308 = vmul.f32 %v293, %v303
  %v309 = vmul.f32 %v294, %v303
  %v310 = vmul.f32 %v295, %v303
  %v311 = vmul.f32 %v296, %v303
  %v312 = vmul.f32 %v297, %v303
  %v313 = vld [vmem:[%s2] sm:$0x1]
  %v315 = vlaneseq
  %v316 = vshrl.u32 %v315, 7
  %v317 = vsub.s32 0, %v316
  %v318 = vrot.slane %v313, %v317
  %v320 = vadd.f32 %v305, %v318
  %v321 = vadd.f32 %v306, %v318
  %v322 = vadd.f32 %v307, %v318
  %v323 = vadd.f32 %v308, %v318
  %v324 = vadd.f32 %v309, %v318
  %v325 = vadd.f32 %v310, %v318
  %v326 = vadd.f32 %v311, %v318
  %v327 = vadd.f32 %v312, %v318
  %v328 = vpack.c.bf16 %v321, %v320
  %v329 = vpack.c.bf16 %v323, %v322
  %v330 = vpack.c.bf16 %v325, %v324
  %v331 = vpack.c.bf16 %v327, %v326
  %332 = vst [vmem:[#allocation2] sm:$0xff] 0.0
  %333 = vst [vmem:[#allocation2 + $0x8] sm:$0xff] 0.0
  %334 = vst [vmem:[#allocation2 + $0x10] sm:$0xff] 0.0
  %335 = vst [vmem:[#allocation2 + $0x18] sm:$0xff] 0.0
  %336 = vst [vmem:[#allocation2 + $0x20] sm:$0xff] 0.0
  %337 = vst [vmem:[#allocation2 + $0x28] sm:$0xff] 0.0
  %338 = vst [vmem:[#allocation2 + $0x30] sm:$0xff] 0.0
  %339 = vst [vmem:[#allocation2 + $0x38] sm:$0xff] 0.0
  %v340 = vld [vmem:[%s3] sm:$0xf]
  %v341 = vld [vmem:[%s3 + $0x4] sm:$0xf]
  %v342 = vld [vmem:[%s3 + $0x8] sm:$0xf]
  %v343 = vld [vmem:[%s3 + $0xc] sm:$0xf]
  %v344 = vld [vmem:[%s3 + $0x10] sm:$0xf]
  %v345 = vld [vmem:[%s3 + $0x14] sm:$0xf]
  %v346 = vld [vmem:[%s3 + $0x18] sm:$0xf]
  %v347 = vld [vmem:[%s3 + $0x1c] sm:$0xf]
  %v348 = vld [vmem:[%s3 + $0x20] sm:$0xf]
  %v349 = vld [vmem:[%s3 + $0x24] sm:$0xf]
  %v350 = vld [vmem:[%s3 + $0x28] sm:$0xf]
  %v351 = vld [vmem:[%s3 + $0x2c] sm:$0xf]
  %v352 = vld [vmem:[%s3 + $0x30] sm:$0xf]
  %v353 = vld [vmem:[%s3 + $0x34] sm:$0xf]
  %v354 = vld [vmem:[%s3 + $0x38] sm:$0xf]
  %v355 = vld [vmem:[%s3 + $0x3c] sm:$0xf]
  %v356 = vld [vmem:[%s4] sm:$0x1]
  %v358 = vlaneseq
  %v359 = vshrl.u32 %v358, 7
  %v360 = vsub.s32 0, %v359
  %v361 = vrot.slane %v356, %v360
  %v379 = vunpack.c.l.b16 %v340
  %v380 = vunpack.c.l.b16 %v341
  %v381 = vunpack.c.l.b16 %v342
  %v382 = vunpack.c.l.b16 %v343
  %v383 = vunpack.c.l.b16 %v344
  %v384 = vunpack.c.l.b16 %v345
  %v385 = vunpack.c.l.b16 %v346
  %v386 = vunpack.c.l.b16 %v347
  %v387 = vunpack.c.l.b16 %v348
  %v388 = vunpack.c.l.b16 %v349
  %v389 = vunpack.c.l.b16 %v350
  %v390 = vunpack.c.l.b16 %v351
  %v391 = vunpack.c.l.b16 %v352
  %v392 = vunpack.c.l.b16 %v353
  %v393 = vunpack.c.l.b16 %v354
  %v394 = vunpack.c.l.b16 %v355
  %v395 = vpack.c.b16 %v380, %v379
  %v396 = vpack.c.b16 %v382, %v381
  %v397 = vpack.c.b16 %v384, %v383
  %v398 = vpack.c.b16 %v386, %v385
  %v399 = vpack.c.b16 %v388, %v387
  %v400 = vpack.c.b16 %v390, %v389
  %v401 = vpack.c.b16 %v392, %v391
  %v402 = vpack.c.b16 %v394, %v393
  %411 = vmatprep.subr.bf16.mxu0 0
  %412 = vmatpush1.bf16.msra.mxu0 %v402
  %413 = vmatprep.subr.bf16.mxu0 0
  %414 = vmatpush1.bf16.msra.mxu0 %v401
  %415 = vmatprep.subr.bf16.mxu0 0
  %416 = vmatpush1.bf16.msra.mxu0 %v400
  %417 = vmatprep.subr.bf16.mxu0 0
  %418 = vmatpush1.bf16.msra.mxu0 %v399
  %419 = vmatprep.subr.bf16.mxu0 0
  %420 = vmatpush1.bf16.msra.mxu0 %v398
  %421 = vmatprep.subr.bf16.mxu0 0
  %422 = vmatpush1.bf16.msra.mxu0 %v397
  %423 = vmatprep.subr.bf16.mxu0 0
  %424 = vmatpush1.bf16.msra.mxu0 %v396
  %425 = vmatprep.subr.bf16.mxu0 0
  %426 = vmatpush1.bf16.msra.mxu0 %v395
  %427 = vmatprep.subr.bf16.mxu0 0
  %428 = vmatpush2.bf16.msra.mxu0 0
  %429 = vmatprep.subr.bf16.mxu0 0
  %430 = vmatpush2.bf16.msra.mxu0 0
  %431 = vmatprep.subr.bf16.mxu0 0
  %432 = vmatpush2.bf16.msra.mxu0 0
  %433 = vmatprep.subr.bf16.mxu0 0
  %434 = vmatpush2.bf16.msra.mxu0 0
  %435 = vmatprep.subr.bf16.mxu0 0
  %436 = vmatpush2.bf16.msra.mxu0 0
  %437 = vmatprep.subr.bf16.mxu0 0
  %438 = vmatpush2.bf16.msra.mxu0 0
  %439 = vmatprep.subr.bf16.mxu0 0
  %440 = vmatpush2.bf16.msra.mxu0 0
  %441 = vmatprep.subr.bf16.mxu0 0
  %442 = vmatpush2.bf16.msra.mxu0 0
  %443 = vmatprep.mubr.bf16.mxu0 0
  %444 = vmatmul.mubr.bf16.gmra.mxu0 %v328
  %v445 = vpop.f32.mrf.mxu0
  %v446 = vadd.f32 %v361, %v445
  %v447 = vpop.f32.mrf.mxu0
  %v448 = vpop.f32.mrf.mxu0
  %v449 = vadd.f32 %v361, %v448
  %v450 = vpop.f32.mrf.mxu0
  %451 = vmatprep.mubr.bf16.mxu0 0
  %452 = vmatmul.mubr.bf16.gmra.mxu0 %v329
  %v453 = vpop.f32.mrf.mxu0
  %v454 = vadd.f32 %v361, %v453
  %v455 = vpop.f32.mrf.mxu0
  %v456 = vpop.f32.mrf.mxu0
  %v457 = vadd.f32 %v361, %v456
  %v458 = vpop.f32.mrf.mxu0
  %459 = vmatprep.mubr.bf16.mxu0 0
  %460 = vmatmul.mubr.bf16.gmra.mxu0 %v330
  %v461 = vpop.f32.mrf.mxu0
  %v462 = vadd.f32 %v361, %v461
  %v463 = vpop.f32.mrf.mxu0
  %v464 = vpop.f32.mrf.mxu0
  %v465 = vadd.f32 %v361, %v464
  %v466 = vpop.f32.mrf.mxu0
  %467 = vmatprep.mubr.bf16.mxu0 0
  %468 = vmatmul.mubr.bf16.gmra.mxu0 %v331
  %v469 = vpop.f32.mrf.mxu0
  %v470 = vadd.f32 %v361, %v469
  %v471 = vpop.f32.mrf.mxu0
  %v472 = vpop.f32.mrf.mxu0
  %v473 = vadd.f32 %v361, %v472
  %v474 = vpop.f32.mrf.mxu0
  %475 = vdwg.mxu0
  %v476 = vmax.f32 %v446, 0.0
  %v477 = vmax.f32 %v449, 0.0
  %v478 = vmax.f32 %v454, 0.0
  %v479 = vmax.f32 %v457, 0.0
  %v480 = vmax.f32 %v462, 0.0
  %v481 = vmax.f32 %v465, 0.0
  %v482 = vmax.f32 %v470, 0.0
  %v483 = vmax.f32 %v473, 0.0
  %v484 = vld [vmem:[#allocation2] sm:$0xff]
  %v485 = vld [vmem:[#allocation2 + $0x8] sm:$0xff]
  %v486 = vld [vmem:[#allocation2 + $0x10] sm:$0xff]
  %v487 = vld [vmem:[#allocation2 + $0x18] sm:$0xff]
  %v488 = vld [vmem:[#allocation2 + $0x20] sm:$0xff]
  %v489 = vld [vmem:[#allocation2 + $0x28] sm:$0xff]
  %v490 = vld [vmem:[#allocation2 + $0x30] sm:$0xff]
  %v491 = vld [vmem:[#allocation2 + $0x38] sm:$0xff]
  %v492 = vpack.c.bf16 %v477, %v476
  %v493 = vpack.c.bf16 %v479, %v478
  %v494 = vpack.c.bf16 %v481, %v480
  %v495 = vpack.c.bf16 %v483, %v482
  %v496 = vld [vmem:[%s5] sm:$0xf]
  %v497 = vld [vmem:[%s5 + $0x4] sm:$0xf]
  %v498 = vld [vmem:[%s5 + $0x8] sm:$0xf]
  %v499 = vld [vmem:[%s5 + $0xc] sm:$0xf]
  %v500 = vld [vmem:[%s5 + $0x10] sm:$0xf]
  %v501 = vld [vmem:[%s5 + $0x14] sm:$0xf]
  %v502 = vld [vmem:[%s5 + $0x18] sm:$0xf]
  %v503 = vld [vmem:[%s5 + $0x1c] sm:$0xf]
  %v504 = vld [vmem:[%s5 + $0x20] sm:$0xf]
  %v505 = vld [vmem:[%s5 + $0x24] sm:$0xf]
  %v506 = vld [vmem:[%s5 + $0x28] sm:$0xf]
  %v507 = vld [vmem:[%s5 + $0x2c] sm:$0xf]
  %v508 = vld [vmem:[%s5 + $0x30] sm:$0xf]
  %v509 = vld [vmem:[%s5 + $0x34] sm:$0xf]
  %v510 = vld [vmem:[%s5 + $0x38] sm:$0xf]
  %v511 = vld [vmem:[%s5 + $0x3c] sm:$0xf]
  %v528 = vunpack.c.l.b16 %v496
  %v529 = vunpack.c.l.b16 %v497
  %v530 = vunpack.c.l.b16 %v498
  %v531 = vunpack.c.l.b16 %v499
  %v532 = vunpack.c.l.b16 %v500
  %v533 = vunpack.c.l.b16 %v501
  %v534 = vunpack.c.l.b16 %v502
  %v535 = vunpack.c.l.b16 %v503
  %v536 = vunpack.c.l.b16 %v504
  %v537 = vunpack.c.l.b16 %v505
  %v538 = vunpack.c.l.b16 %v506
  %v539 = vunpack.c.l.b16 %v507
  %v540 = vunpack.c.l.b16 %v508
  %v541 = vunpack.c.l.b16 %v509
  %v542 = vunpack.c.l.b16 %v510
  %v543 = vunpack.c.l.b16 %v511
  %v544 = vpack.c.b16 %v529, %v528
  %v545 = vpack.c.b16 %v531, %v530
  %v546 = vpack.c.b16 %v533, %v532
  %v547 = vpack.c.b16 %v535, %v534
  %v548 = vpack.c.b16 %v537, %v536
  %v549 = vpack.c.b16 %v539, %v538
  %v550 = vpack.c.b16 %v541, %v540
  %v551 = vpack.c.b16 %v543, %v542
  %560 = vmatprep.subr.bf16.mxu0 0
  %561 = vmatpush1.bf16.msra.mxu0 %v551
  %562 = vmatprep.subr.bf16.mxu0 0
  %563 = vmatpush1.bf16.msra.mxu0 %v550
  %564 = vmatprep.subr.bf16.mxu0 0
  %565 = vmatpush1.bf16.msra.mxu0 %v549
  %566 = vmatprep.subr.bf16.mxu0 0
  %567 = vmatpush1.bf16.msra.mxu0 %v548
  %568 = vmatprep.subr.bf16.mxu0 0
  %569 = vmatpush1.bf16.msra.mxu0 %v547
  %570 = vmatprep.subr.bf16.mxu0 0
  %571 = vmatpush1.bf16.msra.mxu0 %v546
  %572 = vmatprep.subr.bf16.mxu0 0
  %573 = vmatpush1.bf16.msra.mxu0 %v545
  %574 = vmatprep.subr.bf16.mxu0 0
  %575 = vmatpush1.bf16.msra.mxu0 %v544
  %576 = vmatprep.subr.bf16.mxu0 0
  %577 = vmatpush2.bf16.msra.mxu0 0
  %578 = vmatprep.subr.bf16.mxu0 0
  %579 = vmatpush2.bf16.msra.mxu0 0
  %580 = vmatprep.subr.bf16.mxu0 0
  %581 = vmatpush2.bf16.msra.mxu0 0
  %582 = vmatprep.subr.bf16.mxu0 0
  %583 = vmatpush2.bf16.msra.mxu0 0
  %584 = vmatprep.subr.bf16.mxu0 0
  %585 = vmatpush2.bf16.msra.mxu0 0
  %586 = vmatprep.subr.bf16.mxu0 0
  %587 = vmatpush2.bf16.msra.mxu0 0
  %588 = vmatprep.subr.bf16.mxu0 0
  %589 = vmatpush2.bf16.msra.mxu0 0
  %590 = vmatprep.subr.bf16.mxu0 0
  %591 = vmatpush2.bf16.msra.mxu0 0
  %592 = vmatprep.mubr.bf16.mxu0 0
  %593 = vmatmul.mubr.bf16.gmra.mxu0 %v492
  %v594 = vpop.f32.mrf.mxu0
  %v595 = vadd.f32 0.0, %v594
  %v596 = vpop.f32.mrf.mxu0
  %v597 = vpop.f32.mrf.mxu0
  %v598 = vadd.f32 0.0, %v597
  %v599 = vpop.f32.mrf.mxu0
  %600 = vmatprep.mubr.bf16.mxu0 0
  %601 = vmatmul.mubr.bf16.gmra.mxu0 %v493
  %v602 = vpop.f32.mrf.mxu0
  %v603 = vadd.f32 0.0, %v602
  %v604 = vpop.f32.mrf.mxu0
  %v605 = vpop.f32.mrf.mxu0
  %v606 = vadd.f32 0.0, %v605
  %v607 = vpop.f32.mrf.mxu0
  %608 = vmatprep.mubr.bf16.mxu0 0
  %609 = vmatmul.mubr.bf16.gmra.mxu0 %v494
  %v610 = vpop.f32.mrf.mxu0
  %v611 = vadd.f32 0.0, %v610
  %v612 = vpop.f32.mrf.mxu0
  %v613 = vpop.f32.mrf.mxu0
  %v614 = vadd.f32 0.0, %v613
  %v615 = vpop.f32.mrf.mxu0
  %616 = vmatprep.mubr.bf16.mxu0 0
  %617 = vmatmul.mubr.bf16.gmra.mxu0 %v495
  %v618 = vpop.f32.mrf.mxu0
  %v619 = vadd.f32 0.0, %v618
  %v620 = vpop.f32.mrf.mxu0
  %v621 = vpop.f32.mrf.mxu0
  %v622 = vadd.f32 0.0, %v621
  %v623 = vpop.f32.mrf.mxu0
  %624 = vdwg.mxu0
  %v625 = vadd.f32 %v484, %v595
  %v626 = vadd.f32 %v485, %v598
  %v627 = vadd.f32 %v486, %v603
  %v628 = vadd.f32 %v487, %v606
  %v629 = vadd.f32 %v488, %v611
  %v630 = vadd.f32 %v489, %v614
  %v631 = vadd.f32 %v490, %v619
  %v632 = vadd.f32 %v491, %v622
  %633 = vst [vmem:[#allocation2] sm:$0xff] %v625
  %634 = vst [vmem:[#allocation2 + $0x8] sm:$0xff] %v626
  %635 = vst [vmem:[#allocation2 + $0x10] sm:$0xff] %v627
  %636 = vst [vmem:[#allocation2 + $0x18] sm:$0xff] %v628
  %637 = vst [vmem:[#allocation2 + $0x20] sm:$0xff] %v629
  %638 = vst [vmem:[#allocation2 + $0x28] sm:$0xff] %v630
  %639 = vst [vmem:[#allocation2 + $0x30] sm:$0xff] %v631
  %640 = vst [vmem:[#allocation2 + $0x38] sm:$0xff] %v632
  %v641 = vld [vmem:[#allocation2] sm:$0xff]
  %v642 = vld [vmem:[#allocation2 + $0x8] sm:$0xff]
  %v643 = vld [vmem:[#allocation2 + $0x10] sm:$0xff]
  %v644 = vld [vmem:[#allocation2 + $0x18] sm:$0xff]
  %v645 = vld [vmem:[#allocation2 + $0x20] sm:$0xff]
  %v646 = vld [vmem:[#allocation2 + $0x28] sm:$0xff]
  %v647 = vld [vmem:[#allocation2 + $0x30] sm:$0xff]
  %v648 = vld [vmem:[#allocation2 + $0x38] sm:$0xff]
  %v649 = vadd.f32 %v320, %v641
  %v650 = vadd.f32 %v321, %v642
  %v651 = vadd.f32 %v322, %v643
  %v652 = vadd.f32 %v323, %v644
  %v653 = vadd.f32 %v324, %v645
  %v654 = vadd.f32 %v325, %v646
  %v655 = vadd.f32 %v326, %v647
  %v656 = vadd.f32 %v327, %v648
  %v657 = vld [vmem:[%s6] sm:$0x1]
  %v659 = vlaneseq
  %v660 = vshrl.u32 %v659, 7
  %v661 = vsub.s32 0, %v660
  %v662 = vrot.slane %v657, %v661
  %v664 = vadd.f32 %v649, %v662
  %v665 = vadd.f32 %v650, %v662
  %v666 = vadd.f32 %v651, %v662
  %v667 = vadd.f32 %v652, %v662
  %v668 = vadd.f32 %v653, %v662
  %v669 = vadd.f32 %v654, %v662
  %v670 = vadd.f32 %v655, %v662
  %v671 = vadd.f32 %v656, %v662
  %672 = vadd.xlane.f32.xlu0 %v664
  %v673 = vpop.xlane.xlu0 %672
  %674 = vadd.xlane.f32.xlu0 %v665
  %v675 = vpop.xlane.xlu0 %674
  %676 = vadd.xlane.f32.xlu0 %v666
  %v677 = vpop.xlane.xlu0 %676
  %678 = vadd.xlane.f32.xlu0 %v667
  %v679 = vpop.xlane.xlu0 %678
  %680 = vadd.xlane.f32.xlu0 %v668
  %v681 = vpop.xlane.xlu0 %680
  %682 = vadd.xlane.f32.xlu0 %v669
  %v683 = vpop.xlane.xlu0 %682
  %684 = vadd.xlane.f32.xlu0 %v670
  %v685 = vpop.xlane.xlu0 %684
  %686 = vadd.xlane.f32.xlu0 %v671
  %v687 = vpop.xlane.xlu0 %686
  %v688 = vmul.f32 %v673, 0.03125
  %v689 = vmul.f32 %v675, 0.03125
  %v690 = vmul.f32 %v677, 0.03125
  %v691 = vmul.f32 %v679, 0.03125
  %v692 = vmul.f32 %v681, 0.03125
  %v693 = vmul.f32 %v683, 0.03125
  %v694 = vmul.f32 %v685, 0.03125
  %v695 = vmul.f32 %v687, 0.03125
  %v696 = vmul.f32 %v664, %v664
  %v697 = vmul.f32 %v665, %v665
  %v698 = vmul.f32 %v666, %v666
  %v699 = vmul.f32 %v667, %v667
  %v700 = vmul.f32 %v668, %v668
  %v701 = vmul.f32 %v669, %v669
  %v702 = vmul.f32 %v670, %v670
  %v703 = vmul.f32 %v671, %v671
  %704 = vadd.xlane.f32.xlu0 %v696
  %v705 = vpop.xlane.xlu0 %704
  %706 = vadd.xlane.f32.xlu0 %v697
  %v707 = vpop.xlane.xlu0 %706
  %708 = vadd.xlane.f32.xlu0 %v698
  %v709 = vpop.xlane.xlu0 %708
  %710 = vadd.xlane.f32.xlu0 %v699
  %v711 = vpop.xlane.xlu0 %710
  %712 = vadd.xlane.f32.xlu0 %v700
  %v713 = vpop.xlane.xlu0 %712
  %714 = vadd.xlane.f32.xlu0 %v701
  %v715 = vpop.xlane.xlu0 %714
  %716 = vadd.xlane.f32.xlu0 %v702
  %v717 = vpop.xlane.xlu0 %716
  %718 = vadd.xlane.f32.xlu0 %v703
  %v719 = vpop.xlane.xlu0 %718
  %v720 = vmul.f32 %v705, 0.03125
  %v721 = vmul.f32 %v707, 0.03125
  %v722 = vmul.f32 %v709, 0.03125
  %v723 = vmul.f32 %v711, 0.03125
  %v724 = vmul.f32 %v713, 0.03125
  %v725 = vmul.f32 %v715, 0.03125
  %v726 = vmul.f32 %v717, 0.03125
  %v727 = vmul.f32 %v719, 0.03125
  %v728 = vmul.f32 %v688, %v688
  %v729 = vmul.f32 %v689, %v689
  %v730 = vmul.f32 %v690, %v690
  %v731 = vmul.f32 %v691, %v691
  %v732 = vmul.f32 %v692, %v692
  %v733 = vmul.f32 %v693, %v693
  %v734 = vmul.f32 %v694, %v694
  %v735 = vmul.f32 %v695, %v695
  %v736 = vsub.f32 %v720, %v728
  %v737 = vsub.f32 %v721, %v729
  %v738 = vsub.f32 %v722, %v730
  %v739 = vsub.f32 %v723, %v731
  %v740 = vsub.f32 %v724, %v732
  %v741 = vsub.f32 %v725, %v733
  %v742 = vsub.f32 %v726, %v734
  %v743 = vsub.f32 %v727, %v735
  %v744 = vmax.f32 %v736, 0.0
  %v745 = vmax.f32 %v737, 0.0
  %v746 = vmax.f32 %v738, 0.0
  %v747 = vmax.f32 %v739, 0.0
  %v748 = vmax.f32 %v740, 0.0
  %v749 = vmax.f32 %v741, 0.0
  %v750 = vmax.f32 %v742, 0.0
  %v751 = vmax.f32 %v743, 0.0
  %v752 = vsub.f32 %v664, %v688
  %v753 = vsub.f32 %v665, %v689
  %v754 = vsub.f32 %v666, %v690
  %v755 = vsub.f32 %v667, %v691
  %v756 = vsub.f32 %v668, %v692
  %v757 = vsub.f32 %v669, %v693
  %v758 = vsub.f32 %v670, %v694
  %v759 = vsub.f32 %v671, %v695
  %v760 = vadd.f32 %v744, 1e-05
  %v761 = vadd.f32 %v745, 1e-05
  %v762 = vadd.f32 %v746, 1e-05
  %v763 = vadd.f32 %v747, 1e-05
  %v764 = vadd.f32 %v748, 1e-05
  %v765 = vadd.f32 %v749, 1e-05
  %v766 = vadd.f32 %v750, 1e-05
  %v767 = vadd.f32 %v751, 1e-05
  %v768 = vrsqrt.pop %v760
  %v769 = vrsqrt.pop %v761
  %v770 = vrsqrt.pop %v762
  %v771 = vrsqrt.pop %v763
  %v772 = vrsqrt.pop %v764
  %v773 = vrsqrt.pop %v765
  %v774 = vrsqrt.pop %v766
  %v775 = vrsqrt.pop %v767
  %v776 = vmul.f32 %v752, %v768
  %v777 = vmul.f32 %v753, %v769
  %v778 = vmul.f32 %v754, %v770
  %v779 = vmul.f32 %v755, %v771
  %v780 = vmul.f32 %v756, %v772
  %v781 = vmul.f32 %v757, %v773
  %v782 = vmul.f32 %v758, %v774
  %v783 = vmul.f32 %v759, %v775
  %v784 = vld [vmem:[%s7] sm:$0x1]
  %v786 = vlaneseq
  %v787 = vshrl.u32 %v786, 7
  %v788 = vsub.s32 0, %v787
  %v789 = vrot.slane %v784, %v788
  %v791 = vmul.f32 %v776, %v789
  %v792 = vmul.f32 %v777, %v789
  %v793 = vmul.f32 %v778, %v789
  %v794 = vmul.f32 %v779, %v789
  %v795 = vmul.f32 %v780, %v789
  %v796 = vmul.f32 %v781, %v789
  %v797 = vmul.f32 %v782, %v789
  %v798 = vmul.f32 %v783, %v789
  %v799 = vld [vmem:[%s8] sm:$0x1]
  %v801 = vlaneseq
  %v802 = vshrl.u32 %v801, 7
  %v803 = vsub.s32 0, %v802
  %v804 = vrot.slane %v799, %v803
  %v806 = vadd.f32 %v791, %v804
  %v807 = vadd.f32 %v792, %v804
  %v808 = vadd.f32 %v793, %v804
  %v809 = vadd.f32 %v794, %v804
  %v810 = vadd.f32 %v795, %v804
  %v811 = vadd.f32 %v796, %v804
  %v812 = vadd.f32 %v797, %v804
  %v813 = vadd.f32 %v798, %v804
  %814 = vst [vmem:[%s9] sm:$0xff] %v806
  %815 = vst [vmem:[%s9 + $0x8] sm:$0xff] %v807
  %816 = vst [vmem:[%s9 + $0x10] sm:$0xff] %v808
  %817 = vst [vmem:[%s9 + $0x18] sm:$0xff] %v809
  %818 = vst [vmem:[%s9 + $0x20] sm:$0xff] %v810
  %819 = vst [vmem:[%s9 + $0x28] sm:$0xff] %v811
  %820 = vst [vmem:[%s9 + $0x30] sm:$0xff] %v812
  %821 = vst [vmem:[%s9 + $0x38] sm:$0xff] %v813
  // Predicated region
  $region38: #{_lambda_.1} parent=0 // pred_check
    _
  $region39: #{_lambda_.1} parent=0 // pred_check_branch
    %823 = sbr.rel (0) target = $region41
  $region40: #{_lambda_.1} parent=0 // pred_region
    _
  $region41: #{_lambda_.1} parent=0 // pred_fallthru
    _
  // Predicated region
  $region42: #{_lambda_.1} parent=0 // pred_check
    _
  $region43: #{_lambda_.1} parent=0 // pred_check_branch
    %825 = sbr.rel (0) target = $region45
  $region44: #{_lambda_.1} parent=0 // pred_region
    _
  $region45: #{_lambda_.1} parent=0 // pred_fallthru
    _

</llo_original>
